<compile_context>
chip_gen: v7x
topology: tpu7x:2x2x1
jax: 0.10.0
libtpu: 0.0.40
codegen_flags: <defaults>
</compile_context>

<pallas_src>
import functools

import jax
import jax.numpy as jnp
from jax.experimental import pallas as pl
from jax.experimental.pallas import tpu as pltpu


# ---------------------------------------------------------------------------
# Pallas kernels: per (batch, time-chunk) tile   z = (M @ x) [* mask]
# ---------------------------------------------------------------------------
def _mix_mask_kernel(m_ref, x_ref, mask_ref, z_ref):
    # m_ref:    (c, c)       channel-mixing matrix, resident across the whole grid
    # x_ref:    (1, c, Tc)   one (batch, time-chunk) tile in ORIGINAL channel layout
    # mask_ref: (1, 1, Tc)   time mask, broadcast over channels inside the kernel
    # z_ref:    (1, c, Tc)
    z = jnp.dot(m_ref[...], x_ref[0], preferred_element_type=jnp.float32)
    z_ref[0] = (z * mask_ref[0]).astype(z_ref.dtype)


def _mix_kernel(m_ref, x_ref, z_ref):
    # No-mask fast path: drops the mask operand (HBM read) and the VALU multiply.
    z = jnp.dot(m_ref[...], x_ref[0], preferred_element_type=jnp.float32)
    z_ref[0] = z.astype(z_ref.dtype)


def _round_up(v, m):
    return (v + m - 1) // m * m


def _choose_time_tiling(t, max_tc=1024):
    """Pick a lane-dense time chunk (multiple of 128, <= max_tc) and padded length.

    Uses n_steps = ceil(t128 / max_tc) chunks of the smallest 128-multiple that covers
    t128 in that many chunks -> big balanced tiles, waste < one 128-stripe per chunk.
    """
    t128 = _round_up(t, 128)
    n_steps = -(-t128 // max_tc)
    tc = _round_up(-(-t128 // n_steps), 128)
    return tc, tc * n_steps


def _invconv_mix(mix, x, mask, *, tc):
    """mix: (c, c), x: (b, c, t_pad), mask: (b, 1, t_pad) or None -> (b, c, t_pad)."""
    b, c, t_pad = x.shape
    grid = (b, t_pad // tc)

    in_specs = [
        pl.BlockSpec((c, c), lambda bi, ti: (0, 0)),           # resident mixing matrix
        pl.BlockSpec((1, c, tc), lambda bi, ti: (bi, 0, ti)),  # x tile, original layout
    ]
    args = (mix, x)
    if mask is not None:
        in_specs.append(pl.BlockSpec((1, 1, tc), lambda bi, ti: (bi, 0, ti)))
        args = args + (mask,)
        kernel = _mix_mask_kernel
    else:
        kernel = _mix_kernel

    return pl.pallas_call(
        kernel,
        out_shape=jax.ShapeDtypeStruct((b, c, t_pad), x.dtype),
        grid_spec=pltpu.PrefetchScalarGridSpec(
            num_scalar_prefetch=0,
            grid=grid,
            in_specs=in_specs,
            out_specs=pl.BlockSpec((1, c, tc), lambda bi, ti: (bi, 0, ti)),
        ),
        compiler_params=pltpu.CompilerParams(
            dimension_semantics=("parallel", "parallel"),
        ),
    )(*args)


# ---------------------------------------------------------------------------
# Fold the PyTorch view/permute/conv/permute/view into one (c x c) mixing matrix
# ---------------------------------------------------------------------------
def _build_channel_mixing_matrix(weight, c, n_split):
    """M[ch_out, ch_in] = W[s(ch_out), s(ch_in)] if g(ch_out)==g(ch_in) else 0,
    where ch = i*(c//2) + g*(n_split//2) + j and s = i*(n_split//2) + j
    (exactly the PyTorch view/permute index mapping)."""
    ns2 = n_split // 2
    half = c // 2
    ch = jnp.arange(c)
    i_idx = ch // half
    rem = ch % half
    g_idx = rem // ns2
    j_idx = rem % ns2
    s_idx = i_idx * ns2 + j_idx
    w_big = weight[s_idx[:, None], s_idx[None, :]]                  # (c, c)
    same_group = (g_idx[:, None] == g_idx[None, :]).astype(weight.dtype)
    return w_big * same_group


# ---------------------------------------------------------------------------
# Module-equivalent wrapper
# ---------------------------------------------------------------------------
def make_invconv_weight(channels, n_split=4, seed=0):
    """Deterministic re-implementation of InvConvNear.__init__ weight init."""
    del channels  # weight depends only on n_split
    key = jax.random.PRNGKey(seed)
    w = jax.random.normal(key, (n_split, n_split), dtype=jnp.float32)
    q, _ = jnp.linalg.qr(w)
    det = jnp.linalg.det(q)
    q = q.at[:, 0].set(jnp.where(det < 0, -q[:, 0], q[:, 0]))
    return q


def invconv_near_forward(x, weight, x_mask=None, n_split=4,
                         no_jacobian=False, reverse=False):
    """Forward pass of InvConvNear.

    x:      (b, c, t) float32
    weight: (n_split, n_split) float32
    x_mask: (b, 1, t) or None
    returns (z, logdet) with z of shape (b, c, t)
    """
    b, c, t = x.shape
    assert n_split % 2 == 0
    assert c % n_split == 0

    if x_mask is None:
        x_len = jnp.full((b,), t, dtype=x.dtype)
    else:
        x_len = jnp.sum(x_mask, axis=(1, 2)).astype(x.dtype)

    if reverse:
        w_use = jnp.linalg.inv(weight.astype(jnp.float32))
        logdet = None
    else:
        w_use = weight.astype(jnp.float32)
        if no_jacobian:
            logdet = jnp.zeros_like(x_len)
        else:
            sign, logabsdet = jnp.linalg.slogdet(weight.astype(jnp.float32))
            # torch.logdet returns nan for negative determinant
            logdet = jnp.where(sign > 0, logabsdet, jnp.nan) * (c / n_split) * x_len

    # (c, c) mixing matrix in ORIGINAL channel order -> no transposes hit HBM.
    # Keep it in f32 for invertibility precision even if activations are lower precision.
    mix = _build_channel_mixing_matrix(w_use, c, n_split).astype(jnp.float32)

    # Lane-dense time tiling (zero pad -> zero output, sliced off afterwards).
    tc, t_pad = _choose_time_tiling(t)
    if t_pad != t:
        x_p = jnp.pad(x, ((0, 0), (0, 0), (0, t_pad - t)))
        mask_p = (None if x_mask is None
                  else jnp.pad(x_mask.astype(x.dtype), ((0, 0), (0, 0), (0, t_pad - t))))
    else:
        x_p = x
        mask_p = None if x_mask is None else x_mask.astype(x.dtype)

    # --- hot path: Pallas kernel ---
    z = _invconv_mix(mix, x_p, mask_p, tc=tc)
    if t_pad != t:
        z = z[:, :, :t]
    return z, logdet


# ---------------------------------------------------------------------------
# Reference (pure JAX, mirrors the PyTorch ops) for a sanity check
# ---------------------------------------------------------------------------
def _reference_forward(x, weight, x_mask, n_split=4):
    b, c, t = x.shape
    g = c // n_split
    mask = jnp.ones((b, 1, t), x.dtype) if x_mask is None else x_mask
    x_len = (jnp.ones((b,), x.dtype) * t if x_mask is None
             else jnp.sum(x_mask, axis=(1, 2)))
    xs = x.reshape(b, 2, g, n_split // 2, t).transpose(0, 1, 3, 2, 4)
    xs = xs.reshape(b, n_split, g, t)
    z = jnp.einsum("ij,bjgt->bigt", weight, xs)
    z = z.reshape(b, 2, n_split // 2, g, t).transpose(0, 1, 3, 2, 4).reshape(b, c, t)
    z = z * mask
    sign, logabs = jnp.linalg.slogdet(weight)
    logdet = jnp.where(sign > 0, logabs, jnp.nan) * (c / n_split) * x_len
    return z, logdet


if __name__ == "__main__":
    n_split = 4
    b, c, t = 2, 8, 64  # c % n_split == 0

    key = jax.random.PRNGKey(0)
    x = jax.random.normal(key, (b, c, t), dtype=jnp.float32)

    # length-based mask: full length for batch 0, 48 frames for batch 1
    lengths = jnp.array([t, 48], dtype=jnp.int32)
    x_mask = (jnp.arange(t)[None, None, :] < lengths[:, None, None]).astype(jnp.float32)

    weight = make_invconv_weight(c, n_split=n_split, seed=0)

    fwd = jax.jit(functools.partial(invconv_near_forward, n_split=n_split))

    # masked forward
    z, logdet = fwd(x, weight, x_mask)
    jax.block_until_ready(z)
    jax.block_until_ready(logdet)
    z_ref, logdet_ref = _reference_forward(x, weight, x_mask, n_split=n_split)
    assert jnp.allclose(z, z_ref, atol=1e-5, rtol=1e-5), "z mismatch"
    assert jnp.allclose(logdet, logdet_ref, atol=1e-5, rtol=1e-5), "logdet mismatch"

    # no-mask fast path
    z_nm, logdet_nm = fwd(x, weight, None)
    jax.block_until_ready(z_nm)
    z_nm_ref, logdet_nm_ref = _reference_forward(x, weight, None, n_split=n_split)
    assert jnp.allclose(z_nm, z_nm_ref, atol=1e-5, rtol=1e-5), "no-mask z mismatch"
    assert jnp.allclose(logdet_nm, logdet_nm_ref, atol=1e-5, rtol=1e-5), "no-mask logdet mismatch"

    # reverse path (round-trip recovers masked input)
    rev = jax.jit(functools.partial(invconv_near_forward, n_split=n_split, reverse=True))
    z_rev, _ = rev(z, weight, x_mask)
    jax.block_until_ready(z_rev)
    assert jnp.allclose(z_rev, x * x_mask, atol=1e-4, rtol=1e-4), "inverse mismatch"

    print("KERNEL_OK")
</pallas_src>

<mosaic_0001>
module attributes {stable_mosaic.version = 11 : i64} {
  func.func @_mix_mask_kernel(%arg0: i32, %arg1: i32, %arg2: memref<8x8xf32, #tpu.memory_space<vmem>>, %arg3: memref<1x8x128xf32, #tpu.memory_space<vmem>>, %arg4: memref<1x1x128xf32, #tpu.memory_space<vmem>>, %arg5: memref<1x8x128xf32, #tpu.memory_space<vmem>>) attributes {dimension_semantics = [#tpu.dimension_semantics<parallel>, #tpu.dimension_semantics<parallel>], iteration_bounds = array<i64: 2, 1>, scalar_prefetch = 0 : i64, scratch_operands = 0 : i64, tpu.core_type = #tpu.core_type<tc>, window_params = [{pipeline_mode = #tpu.pipeline_mode<synchronous>, transform_indices = @transform_0, window_bounds = array<i64: 8, 8>}, {transform_indices = @transform_1, window_bounds = array<i64: 1, 8, 128>}, {transform_indices = @transform_2, window_bounds = array<i64: 1, 1, 128>}, {transform_indices = @transform_3, window_bounds = array<i64: 1, 8, 128>}]} {
    %c0 = arith.constant 0 : index
    %c0_0 = arith.constant 0 : index
    %0 = vector.load %arg2[%c0, %c0_0] : memref<8x8xf32, #tpu.memory_space<vmem>>, vector<8x8xf32>
    %c0_1 = arith.constant 0 : index
    %c0_2 = arith.constant 0 : index
    %c0_3 = arith.constant 0 : index
    %1 = vector.load %arg3[%c0_1, %c0_2, %c0_3] : memref<1x8x128xf32, #tpu.memory_space<vmem>>, vector<1x8x128xf32>
    %2 = vector.shape_cast %1 : vector<1x8x128xf32> to vector<8x128xf32>
    %cst = arith.constant dense<0.000000e+00> : vector<8x128xf32>
    %3 = tpu.matmul %0, %2, %cst {dimension_numbers = #tpu.dot_dimension_numbers<[1], [0], [0], [1], [0, 0, 1, 1], [], []>} : vector<8x8xf32>, vector<8x128xf32>, vector<8x128xf32> -> vector<8x128xf32>
    %c0_4 = arith.constant 0 : index
    %c0_5 = arith.constant 0 : index
    %c0_6 = arith.constant 0 : index
    %4 = vector.load %arg4[%c0_4, %c0_5, %c0_6] : memref<1x1x128xf32, #tpu.memory_space<vmem>>, vector<1x1x128xf32>
    %5 = vector.shape_cast %4 : vector<1x1x128xf32> to vector<1x128xf32>
    %6 = vector.broadcast %5 : vector<1x128xf32> to vector<8x128xf32>
    %7 = arith.mulf %3, %6 : vector<8x128xf32>
    %c0_7 = arith.constant 0 : index
    %c0_8 = arith.constant 0 : index
    %c0_9 = arith.constant 0 : index
    %8 = vector.load %arg5[%c0_7, %c0_8, %c0_9] : memref<1x8x128xf32, #tpu.memory_space<vmem>>, vector<1x8x128xf32>
    %9 = vector.shape_cast %8 : vector<1x8x128xf32> to vector<8x128xf32>
    %10 = vector.shape_cast %7 : vector<8x128xf32> to vector<1x8x128xf32>
    tpu.vector_store %arg5[%c0_7, %c0_8, %c0_9], %10 {strides = array<i32>} : memref<1x8x128xf32, #tpu.memory_space<vmem>>, vector<1x8x128xf32>,
    return
  }
  func.func @transform_0(%arg0: i32, %arg1: i32) -> (i32, i32) {
    %c0_i32 = arith.constant 0 : i32
    %c0_i32_0 = arith.constant 0 : i32
    %c0_i32_1 = arith.constant 0 : i32
    return %c0_i32, %c0_i32_0 : i32, i32
  }
  func.func @transform_1(%arg0: i32, %arg1: i32) -> (i32, i32, i32) {
    %c0_i32 = arith.constant 0 : i32
    %c0_i32_0 = arith.constant 0 : i32
    return %arg0, %c0_i32, %arg1 : i32, i32, i32
  }
  func.func @transform_2(%arg0: i32, %arg1: i32) -> (i32, i32, i32) {
    %c0_i32 = arith.constant 0 : i32
    %c0_i32_0 = arith.constant 0 : i32
    return %arg0, %c0_i32, %arg1 : i32, i32, i32
  }
  func.func @transform_3(%arg0: i32, %arg1: i32) -> (i32, i32, i32) {
    %c0_i32 = arith.constant 0 : i32
    %c0_i32_0 = arith.constant 0 : i32
    return %arg0, %c0_i32, %arg1 : i32, i32, i32
  }
}

</mosaic_0001>

<llo_original>
// kernel: custom-call.2
$region0: #{custom-call.2}
  %s0 = inlined_call_operand.vmem [shape: f32[4,4], index: 0, kind: input, shape index: {}]
  %s1 = inlined_call_operand.vmem [shape: f32[4,4], index: 1, kind: output, shape index: {0}]
  %s2 = inlined_call_operand.vmem [shape: s32[4], index: 2, kind: output, shape index: {1}]
  %s3 = inlined_call_operand.hbm [shape: s32[4], index: 3, kind: output, shape index: {2}]
  %4 = xla_tuple %s1, %s2, %s3
  $region1: #{custom-call.2} parent=0
    #allocation0 [shape = 'u8[4096]{0}', space=vmem, size = 0x1000, scoped, tag = 'operand span for operand 0']
    #allocation1 [shape = 'u8[2048]{0}', space=vmem, size = 0x800, scoped, tag = 'packed  for operand 0']
    #allocation2 [shape = 'u8[4096]{0}', space=vmem, size = 0x1000, scoped, tag = 'operand span for operand 1']
    #allocation3 [shape = 'u8[2048]{0}', space=vmem, size = 0x800, scoped, tag = 'packed  for operand 1']
    #allocation4 [shape = 'u8[4096]{0}', space=vmem, size = 0x1000, scoped, tag = 'operand span for operand 2']
    #allocation5 [shape = 'u8[512]{0}', space=vmem, size = 0x400, scoped, tag = 'packed  for operand 2']
    #allocation6 [shape = 'u8[4096]{0}', space=vmem, size = 0x1000, scoped, tag = 'operand span for operand 3']
    #allocation7 [shape = 'u8[512]{0}', space=vmem, size = 0x400, scoped, tag = 'packed  for operand 3']
    #allocation8 [shape = 's32[1]{0}', space=sflag, size = 0x4, scoped, tag = 'scoped memory for custom-call.2']
    #allocation9 [shape = 's32[4,128]{1,0}', space=vmem, size = 0x1000, scoped, tag = 'scratch for permutations']
    %5 = vsyncpa [#allocation8], 0
    %p7 = scmp.gt.s32.totalorder 4, 0
    // Predicated region
    $region2: #{custom-call.2} parent=1 // pred_check
      %p8 = pneg %p7
    $region3: #{custom-call.2} parent=1 // pred_check_branch
      %10 = sbr.rel (%p8) target = $region5
    $region4: #{custom-call.2} parent=1 // pred_region
      %s11 = sshra.s32 4, 3
      %p12 = scmp.gt.s32.totalorder %s11, 0
      // Predicated region
      $region6: #{custom-call.2} parent=4 // pred_check
        %p13 = pneg %p12
      $region7: #{custom-call.2} parent=4 // pred_check_branch
        %15 = sbr.rel (%p13) target = $region9
      $region8: #{custom-call.2} parent=4 // pred_region
        %s16 = ssub.s32 %s11, 1
        %s17 = smul.u32 %s16, 128
        %s18 = sshra.s32 %s17, 4
        %s19 = scalar_lea.vmem %s0, %s18
        %v20 = vld [vmem:[%s0] sm:$0xff]
        // While loop
        $region10: #{custom-call.2} parent=8 // loop_pre_header
          _
        $region11: #{custom-call.2} parent=8 // loop_header
          %s21 = sphi %s0, %s43
          %s22 = sphi [#allocation1], %s44
          %v23 = vphi %v20, %v45
          %s24 = ssub.s32 %s19, 64
          %p25 = scmp.gt.s32.totalorder %s21, %s24
        $region12: #{custom-call.2} parent=8 // loop_header_branch
          %27 = sbr.rel (%p25) target = $region16
        $region13: #{custom-call.2} parent=8 // loop_body
          %28 = vst [vmem:[%s22] sm:$0xff] %v23
          %v29 = vld [vmem:[%s21 + $0x8] sm:$0xff]
          %30 = vst [vmem:[%s22 + $0x8] sm:$0xff] %v29
          %v31 = vld [vmem:[%s21 + $0x10] sm:$0xff]
          %32 = vst [vmem:[%s22 + $0x10] sm:$0xff] %v31
          %v33 = vld [vmem:[%s21 + $0x18] sm:$0xff]
          %34 = vst [vmem:[%s22 + $0x18] sm:$0xff] %v33
          %v35 = vld [vmem:[%s21 + $0x20] sm:$0xff]
          %36 = vst [vmem:[%s22 + $0x20] sm:$0xff] %v35
          %v37 = vld [vmem:[%s21 + $0x28] sm:$0xff]
          %38 = vst [vmem:[%s22 + $0x28] sm:$0xff] %v37
          %v39 = vld [vmem:[%s21 + $0x30] sm:$0xff]
          %40 = vst [vmem:[%s22 + $0x30] sm:$0xff] %v39
          %v41 = vld [vmem:[%s21 + $0x38] sm:$0xff]
          %42 = vst [vmem:[%s22 + $0x38] sm:$0xff] %v41
        $region14: #{custom-call.2} parent=8 // loop_footer
          %s43 = scalar_lea.vmem %s21, 64
          %s44 = scalar_lea.vmem %s22, 64
          %v45 = vld [vmem:[%s21 + $0x40] sm:$0xff]
        $region15: #{custom-call.2} parent=8 // loop_footer_branch
          %46 = sbr.rel target = $region11
        $region16: #{custom-call.2} parent=8 // loop_exit
          _
        // While loop
        $region17: #{custom-call.2} parent=8 // loop_pre_header
          _
        $region18: #{custom-call.2} parent=8 // loop_header
          %s47 = sphi %s21, %s55
          %s48 = sphi %s22, %s56
          %v49 = vphi %v23, %v49
          %p50 = scmp.gt.s32.totalorder %s47, %s19
        $region19: #{custom-call.2} parent=8 // loop_header_branch
          %52 = sbr.rel (%p50) target = $region23
        $region20: #{custom-call.2} parent=8 // loop_body
          %v53 = vld [vmem:[%s47] sm:$0xff]
          %54 = vst [vmem:[%s48] sm:$0xff] %v53
        $region21: #{custom-call.2} parent=8 // loop_footer
          %s55 = scalar_lea.vmem %s47, 8
          %s56 = scalar_lea.vmem %s48, 8
        $region22: #{custom-call.2} parent=8 // loop_footer_branch
          %57 = sbr.rel target = $region18
        $region23: #{custom-call.2} parent=8 // loop_exit
          _
      $region9: #{custom-call.2} parent=4 // pred_fallthru
        _
      %s58 = sand.u32 4, 7
      %s59 = sshllo.u32 0, %s58
      %s60 = smul.u32 %s11, 128
      %s61 = sshra.s32 %s60, 4
      %s62 = scalar_lea.vmem [#allocation1], %s61
      %s63 = smul.u32 %s11, 128
      %s64 = sshra.s32 %s63, 4
      %s65 = scalar_lea.vmem %s0, %s64
      %v66 = vld [vmem:[%s65] sm:%s59]
      %67 = vst [vmem:[%s62] sm:%s59] %v66
    $region5: #{custom-call.2} parent=1 // pred_fallthru
      _
    %s69 = sshllo.u32 0, 4
    %v70 = vld [vmem:[#allocation1] sm:%s69]
    %71 = vst [vmem:[#allocation0] sm:%s69] %v70
    %v72 = vld [vmem:[#allocation0] sm:$0xff]
    %73 = vst [vmem:[#allocation2] sm:$0xff] %v72
    %74 = vst [vmem:[#allocation4] sm:$0x1] 0
    %v75 = vlaneseq
    %v76 = vshrl.u32 %v75, 7
    %v77 = vmov %v76
    %79 = vst [vmem:[#allocation9] sm:$0xff] %v77
    loop: start=0, step=1, limit=4
    $region25: #{custom-call.2} parent=1 // loop_pre_header
      _
    $region26: #{custom-call.2} parent=1 // loop_header
      %s81 = sphi 0, %s85
      %p82 = scmp.ge.s32.totalorder %s81, 4
    $region27: #{custom-call.2} parent=1 // loop_header_branch
      %84 = sbr.rel (%p82) target = $region31
    $region28: #{custom-call.2} parent=1 // loop_body
      %v86 = vstv %s81
      %v87 = vlaneseq
      %v88 = vshrl.u32 %v87, 7
      %v89 = vmov %v88
      %v90 = vld [vmem:[#allocation2] sm:$0xff]
      %v91 = vand.u32 2147483647, %v90
      %v93 = vstv %s81
      %vm94 = vcmp.ge.s32.totalorder %v89, %v93
      %vm95 = vcmp.lt.s32.totalorder %v89, 4
      %vm96 = vmand %vm94, %vm95
      %vm97 = vcmp.lt.f32.partialorder -inf, %v91
      %vm98 = vmand %vm96, %vm97
      %v99 = vsel %vm98, %v89, %v86
      %v100 = vsel %vm98, %v91, -inf
      %v101 = vrot.slane %v100, 1
      %v102 = vrot.slane %v99, 1
      %vm103 = vcmp.ge.f32.partialorder %v101, %v100
      %v104 = vsel %vm103, %v101, %v100
      %v105 = vsel %vm103, %v102, %v99
      %v106 = vrot.slane %v101, 1
      %v107 = vrot.slane %v102, 1
      %vm108 = vcmp.ge.f32.partialorder %v106, %v104
      %v109 = vsel %vm108, %v106, %v104
      %v110 = vsel %vm108, %v107, %v105
      %v111 = vrot.slane %v106, 1
      %v112 = vrot.slane %v107, 1
      %vm113 = vcmp.ge.f32.partialorder %v111, %v109
      %v114 = vsel %vm113, %v111, %v109
      %v115 = vsel %vm113, %v112, %v110
      %v116 = vrot.slane %v111, 1
      %v117 = vrot.slane %v112, 1
      %vm118 = vcmp.ge.f32.partialorder %v116, %v114
      %v119 = vsel %vm118, %v116, %v114
      %v120 = vsel %vm118, %v117, %v115
      %v121 = vrot.slane %v116, 1
      %v122 = vrot.slane %v117, 1
      %vm123 = vcmp.ge.f32.partialorder %v121, %v119
      %v124 = vsel %vm123, %v121, %v119
      %v125 = vsel %vm123, %v122, %v120
      %v126 = vrot.slane %v121, 1
      %v127 = vrot.slane %v122, 1
      %vm128 = vcmp.ge.f32.partialorder %v126, %v124
      %v129 = vsel %vm128, %v126, %v124
      %v130 = vsel %vm128, %v127, %v125
      %v131 = vrot.slane %v126, 1
      %v132 = vrot.slane %v127, 1
      %vm133 = vcmp.ge.f32.partialorder %v131, %v129
      %v134 = vsel %vm133, %v131, %v129
      %v135 = vsel %vm133, %v132, %v130
      %s136 = ssub.s32 128, %s81
      %137 = vrot.lane.b32.xlu0 %v135, %s136
      %v138 = vpop.permute.xlu0 %137
      %s139 = vtos %v138
      %v140 = vstv %s81
      %v141 = vlaneseq
      %v142 = vand.u32 %v141, 127
      %vm143 = vcmp.eq.s32.totalorder %v142, %v140
      %v144 = vstv %s139
      %v145 = vld [vmem:[#allocation4] ss:$0 sm:$0xff]
      %v146 = vsel %vm143, %v144, %v145
      %147 = vst [vmem:[#allocation4] sm:$0x1] %v146
      %s148 = scalar_lea.vmem [#allocation2], %s81
      %s149 = scalar_lea.vmem [#allocation2], %s139
      %v150 = vld [vmem:[%s148] ss:$0 sm:$0xff]
      %v151 = vld [vmem:[%s149] ss:$0 sm:$0xff]
      %152 = vst [vmem:[%s149] sm:$0x1] %v150
      %153 = vst [vmem:[%s148] sm:$0x1] %v151
      %s154 = scalar_lea.vmem [#allocation9], %s81
      %s155 = scalar_lea.vmem [#allocation9], %s139
      %v156 = vld [vmem:[%s154] ss:$0 sm:$0xff]
      %v157 = vld [vmem:[%s155] ss:$0 sm:$0xff]
      %158 = vst [vmem:[%s155] sm:$0x1] %v156
      %159 = vst [vmem:[%s154] sm:$0x1] %v157
      %vm160 = vcmp.ne.f32.partialorder %v151, 0.0
      %vm161 = vmand %vm143, %vm160
      %v162 = vsel %vm161, %v151, 1.0
      %v163 = vlaneseq
      %v164 = vand.u32 %v163, 127
      %v165 = vstv %s81
      %vm166 = vcmp.gt.s32.totalorder %v164, %v165
      %v167 = vsel %vm166, %v151, 0.0
      %v168 = vlaneseq
      %v169 = vshrl.u32 %v168, 7
      %v170 = vmov %v169
      %v171 = vld [vmem:[#allocation2] sm:$0xff]
      %v173 = vstv %s81
      %vm174 = vcmp.gt.s32.totalorder %v170, %v173
      %v175 = vsel %vm174, %v162, 1.0
      %v176 = vrcp.pop %v175
      %v177 = vmul.f32 %v171, %v176
      %vm178 = vmand %vm174, %vm143
      %v179 = vsel %vm178, %v177, 0.0
      %180 = vadd.xlane.f32.xlu0 %v179
      %v181 = vpop.xlane.xlu0 %180
      %v182 = vmul.f32 %v181, %v167
      %v183 = vsub.f32 %v177, %v182
      %184 = vst [vmem:[#allocation2] sm:$0xff] %v183
    $region29: #{custom-call.2} parent=1 // loop_footer
      %s85 = sadd.s32 1, %s81
    $region30: #{custom-call.2} parent=1 // loop_footer_branch
      %80 = sbr.rel target = $region26
    $region31: #{custom-call.2} parent=1 // loop_exit
      _
    %v185 = vld [vmem:[#allocation9] sm:$0xff]
    %s186 = scalar_lea.vmem [#allocation9], 8
    %s187 = scalar_lea.vmem [#allocation9], 16
    %s188 = scalar_lea.vmem [#allocation9], 24
    %s189 = scalar_lea.vmem [#allocation9], 32
    %s190 = scalar_lea.vmem [#allocation9], 40
    %s191 = scalar_lea.vmem [#allocation9], 48
    %s192 = scalar_lea.vmem [#allocation9], 56
    %s193 = scalar_lea.vmem [#allocation9], 64
    %s194 = scalar_lea.vmem [#allocation9], 72
    %s195 = scalar_lea.vmem [#allocation9], 80
    %s196 = scalar_lea.vmem [#allocation9], 88
    %s197 = scalar_lea.vmem [#allocation9], 96
    %s198 = scalar_lea.vmem [#allocation9], 104
    %s199 = scalar_lea.vmem [#allocation9], 112
    %s200 = scalar_lea.vmem [#allocation9], 120
    %201 = vxpose.xlu0.b32.start [1/16] %v185, 128
    %202 = vxpose.xlu0.b32.cont [2/16] 0, 128
    %203 = vxpose.xlu0.b32.cont [3/16] 0, 128
    %204 = vxpose.xlu0.b32.cont [4/16] 0, 128
    %205 = vxpose.xlu0.b32.cont [5/16] 0, 128
    %206 = vxpose.xlu0.b32.cont [6/16] 0, 128
    %207 = vxpose.xlu0.b32.cont [7/16] 0, 128
    %208 = vxpose.xlu0.b32.cont [8/16] 0, 128
    %209 = vxpose.xlu0.b32.cont [9/16] 0, 128
    %210 = vxpose.xlu0.b32.cont [10/16] 0, 128
    %211 = vxpose.xlu0.b32.cont [11/16] 0, 128
    %212 = vxpose.xlu0.b32.cont [12/16] 0, 128
    %213 = vxpose.xlu0.b32.cont [13/16] 0, 128
    %214 = vxpose.xlu0.b32.cont [14/16] 0, 128
    %215 = vxpose.xlu0.b32.cont [15/16] 0, 128
    %216 = vxpose.xlu0.b32.end [16/16] 0, 128
    %v217 = vpop.trf.xlu0
    %v218 = vpop.trf.xlu0
    %v219 = vpop.trf.xlu0
    %v220 = vpop.trf.xlu0
    %v221 = vpop.trf.xlu0
    %v222 = vpop.trf.xlu0
    %v223 = vpop.trf.xlu0
    %v224 = vpop.trf.xlu0
    %v225 = vpop.trf.xlu0
    %v226 = vpop.trf.xlu0
    %v227 = vpop.trf.xlu0
    %v228 = vpop.trf.xlu0
    %v229 = vpop.trf.xlu0
    %v230 = vpop.trf.xlu0
    %v231 = vpop.trf.xlu0
    %v232 = vpop.trf.xlu0
    %233 = vst [vmem:[#allocation6] sm:$0x1] %v217
    %s235 = sshllo.u32 0, 4
    %v237 = vld [vmem:[#allocation2] sm:%s235]
    %s238 = sshllo.u32 0, 4
    %239 = vst [vmem:[#allocation3] sm:%s238] %v237
    %s241 = sshllo.u32 0, 1
    %v243 = vld [vmem:[#allocation4] sm:%s241]
    %s244 = sshllo.u32 0, 1
    %245 = vst [vmem:[#allocation5] sm:%s244] %v243
    %s247 = sshllo.u32 0, 1
    %v249 = vld [vmem:[#allocation6] sm:%s247]
    %s250 = sshllo.u32 0, 1
    %251 = vst [vmem:[#allocation7] sm:%s250] %v249
    %p253 = scmp.gt.s32.totalorder 4, 0
    // Predicated region
    $region32: #{custom-call.2} parent=1 // pred_check
      %p254 = pneg %p253
    $region33: #{custom-call.2} parent=1 // pred_check_branch
      %256 = sbr.rel (%p254) target = $region35
    $region34: #{custom-call.2} parent=1 // pred_region
      %s257 = sshra.s32 4, 3
      %p258 = scmp.gt.s32.totalorder %s257, 0
      // Predicated region
      $region36: #{custom-call.2} parent=34 // pred_check
        %p259 = pneg %p258
      $region37: #{custom-call.2} parent=34 // pred_check_branch
        %261 = sbr.rel (%p259) target = $region39
      $region38: #{custom-call.2} parent=34 // pred_region
        %s262 = ssub.s32 %s257, 1
        %s263 = smul.u32 %s262, 128
        %s264 = sshra.s32 %s263, 4
        %s265 = scalar_lea.vmem [#allocation3], %s264
        %v266 = vld [vmem:[#allocation3] sm:$0xff]
        // While loop
        $region40: #{custom-call.2} parent=38 // loop_pre_header
          _
        $region41: #{custom-call.2} parent=38 // loop_header
          %s267 = sphi [#allocation3], %s289
          %s268 = sphi %s1, %s290
          %v269 = vphi %v266, %v291
          %s270 = ssub.s32 %s265, 64
          %p271 = scmp.gt.s32.totalorder %s267, %s270
        $region42: #{custom-call.2} parent=38 // loop_header_branch
          %273 = sbr.rel (%p271) target = $region46
        $region43: #{custom-call.2} parent=38 // loop_body
          %274 = vst [vmem:[%s268] sm:$0xff] %v269
          %v275 = vld [vmem:[%s267 + $0x8] sm:$0xff]
          %276 = vst [vmem:[%s268 + $0x8] sm:$0xff] %v275
          %v277 = vld [vmem:[%s267 + $0x10] sm:$0xff]
          %278 = vst [vmem:[%s268 + $0x10] sm:$0xff] %v277
          %v279 = vld [vmem:[%s267 + $0x18] sm:$0xff]
          %280 = vst [vmem:[%s268 + $0x18] sm:$0xff] %v279
          %v281 = vld [vmem:[%s267 + $0x20] sm:$0xff]
          %282 = vst [vmem:[%s268 + $0x20] sm:$0xff] %v281
          %v283 = vld [vmem:[%s267 + $0x28] sm:$0xff]
          %284 = vst [vmem:[%s268 + $0x28] sm:$0xff] %v283
          %v285 = vld [vmem:[%s267 + $0x30] sm:$0xff]
          %286 = vst [vmem:[%s268 + $0x30] sm:$0xff] %v285
          %v287 = vld [vmem:[%s267 + $0x38] sm:$0xff]
          %288 = vst [vmem:[%s268 + $0x38] sm:$0xff] %v287
        $region44: #{custom-call.2} parent=38 // loop_footer
          %s289 = scalar_lea.vmem %s267, 64
          %s290 = scalar_lea.vmem %s268, 64
          %v291 = vld [vmem:[%s267 + $0x40] sm:$0xff]
        $region45: #{custom-call.2} parent=38 // loop_footer_branch
          %292 = sbr.rel target = $region41
        $region46: #{custom-call.2} parent=38 // loop_exit
          _
        // While loop
        $region47: #{custom-call.2} parent=38 // loop_pre_header
          _
        $region48: #{custom-call.2} parent=38 // loop_header
          %s293 = sphi %s267, %s301
          %s294 = sphi %s268, %s302
          %v295 = vphi %v269, %v295
          %p296 = scmp.gt.s32.totalorder %s293, %s265
        $region49: #{custom-call.2} parent=38 // loop_header_branch
          %298 = sbr.rel (%p296) target = $region53
        $region50: #{custom-call.2} parent=38 // loop_body
          %v299 = vld [vmem:[%s293] sm:$0xff]
          %300 = vst [vmem:[%s294] sm:$0xff] %v299
        $region51: #{custom-call.2} parent=38 // loop_footer
          %s301 = scalar_lea.vmem %s293, 8
          %s302 = scalar_lea.vmem %s294, 8
        $region52: #{custom-call.2} parent=38 // loop_footer_branch
          %303 = sbr.rel target = $region48
        $region53: #{custom-call.2} parent=38 // loop_exit
          _
      $region39: #{custom-call.2} parent=34 // pred_fallthru
        _
      %s304 = sand.u32 4, 7
      %s305 = sshllo.u32 0, %s304
      %s306 = smul.u32 %s257, 128
      %s307 = sshra.s32 %s306, 4
      %s308 = scalar_lea.vmem %s1, %s307
      %s309 = smul.u32 %s257, 128
      %s310 = sshra.s32 %s309, 4
      %s311 = scalar_lea.vmem [#allocation3], %s310
      %v312 = vld [vmem:[%s311] sm:%s305]
      %313 = vst [vmem:[%s308] sm:%s305] %v312
    $region35: #{custom-call.2} parent=1 // pred_fallthru
      _
    // Predicated region
    $region54: #{custom-call.2} parent=1 // pred_check
      _
    $region55: #{custom-call.2} parent=1 // pred_check_branch
      %315 = sbr.rel (0) target = $region57
    $region56: #{custom-call.2} parent=1 // pred_region
      %p317 = scmp.gt.s32.totalorder 1, 0
      // Predicated region
      $region58: #{custom-call.2} parent=56 // pred_check
        %p318 = pneg %p317
      $region59: #{custom-call.2} parent=56 // pred_check_branch
        %320 = sbr.rel (%p318) target = $region61
      $region60: #{custom-call.2} parent=56 // pred_region
        %s321 = sshra.s32 1, 3
        %p322 = scmp.gt.s32.totalorder %s321, 0
        // Predicated region
        $region62: #{custom-call.2} parent=60 // pred_check
          %p323 = pneg %p322
        $region63: #{custom-call.2} parent=60 // pred_check_branch
          %325 = sbr.rel (%p323) target = $region65
        $region64: #{custom-call.2} parent=60 // pred_region
          %s326 = ssub.s32 %s321, 1
          %s327 = smul.u32 %s326, 128
          %s328 = sshra.s32 %s327, 4
          %s329 = scalar_lea.vmem [#allocation5], %s328
          %v330 = vld [vmem:[#allocation5] sm:$0xff]
          // While loop
          $region66: #{custom-call.2} parent=64 // loop_pre_header
            _
          $region67: #{custom-call.2} parent=64 // loop_header
            %s331 = sphi [#allocation5], %s353
            %s332 = sphi %s2, %s354
            %v333 = vphi %v330, %v355
            %s334 = ssub.s32 %s329, 64
            %p335 = scmp.gt.s32.totalorder %s331, %s334
          $region68: #{custom-call.2} parent=64 // loop_header_branch
            %337 = sbr.rel (%p335) target = $region72
          $region69: #{custom-call.2} parent=64 // loop_body
            %338 = vst [vmem:[%s332] sm:$0xff] %v333
            %v339 = vld [vmem:[%s331 + $0x8] sm:$0xff]
            %340 = vst [vmem:[%s332 + $0x8] sm:$0xff] %v339
            %v341 = vld [vmem:[%s331 + $0x10] sm:$0xff]
            %342 = vst [vmem:[%s332 + $0x10] sm:$0xff] %v341
            %v343 = vld [vmem:[%s331 + $0x18] sm:$0xff]
            %344 = vst [vmem:[%s332 + $0x18] sm:$0xff] %v343
            %v345 = vld [vmem:[%s331 + $0x20] sm:$0xff]
            %346 = vst [vmem:[%s332 + $0x20] sm:$0xff] %v345
            %v347 = vld [vmem:[%s331 + $0x28] sm:$0xff]
            %348 = vst [vmem:[%s332 + $0x28] sm:$0xff] %v347
            %v349 = vld [vmem:[%s331 + $0x30] sm:$0xff]
            %350 = vst [vmem:[%s332 + $0x30] sm:$0xff] %v349
            %v351 = vld [vmem:[%s331 + $0x38] sm:$0xff]
            %352 = vst [vmem:[%s332 + $0x38] sm:$0xff] %v351
          $region70: #{custom-call.2} parent=64 // loop_footer
            %s353 = scalar_lea.vmem %s331, 64
            %s354 = scalar_lea.vmem %s332, 64
            %v355 = vld [vmem:[%s331 + $0x40] sm:$0xff]
          $region71: #{custom-call.2} parent=64 // loop_footer_branch
            %356 = sbr.rel target = $region67
          $region72: #{custom-call.2} parent=64 // loop_exit
            _
          // While loop
          $region73: #{custom-call.2} parent=64 // loop_pre_header
            _
          $region74: #{custom-call.2} parent=64 // loop_header
            %s357 = sphi %s331, %s365
            %s358 = sphi %s332, %s366
            %v359 = vphi %v333, %v359
            %p360 = scmp.gt.s32.totalorder %s357, %s329
          $region75: #{custom-call.2} parent=64 // loop_header_branch
            %362 = sbr.rel (%p360) target = $region79
          $region76: #{custom-call.2} parent=64 // loop_body
            %v363 = vld [vmem:[%s357] sm:$0xff]
            %364 = vst [vmem:[%s358] sm:$0xff] %v363
          $region77: #{custom-call.2} parent=64 // loop_footer
            %s365 = scalar_lea.vmem %s357, 8
            %s366 = scalar_lea.vmem %s358, 8
          $region78: #{custom-call.2} parent=64 // loop_footer_branch
            %367 = sbr.rel target = $region74
          $region79: #{custom-call.2} parent=64 // loop_exit
            _
        $region65: #{custom-call.2} parent=60 // pred_fallthru
          _
        %s368 = sand.u32 1, 7
        %s369 = sshllo.u32 0, %s368
        %s370 = smul.u32 %s321, 128
        %s371 = sshra.s32 %s370, 4
        %s372 = scalar_lea.vmem %s2, %s371
        %s373 = smul.u32 %s321, 128
        %s374 = sshra.s32 %s373, 4
        %s375 = scalar_lea.vmem [#allocation5], %s374
        %v376 = vld [vmem:[%s375] sm:%s369]
        %377 = vst [vmem:[%s372] sm:%s369] %v376
      $region61: #{custom-call.2} parent=56 // pred_fallthru
        _
    $region57: #{custom-call.2} parent=1 // pred_fallthru
      _
    // Predicated region
    $region80: #{custom-call.2} parent=1 // pred_check
      _
    $region81: #{custom-call.2} parent=1 // pred_check_branch
      %379 = sbr.rel (0) target = $region83
    $region82: #{custom-call.2} parent=1 // pred_region
      %s381 = ssub.s32 16, 16
      %382 = vsyncadd [#allocation8], %s381
      %s383 = sshll.u32 [#allocation7], 4
      %s384 = int_to_ptr.vmem [resolvable:$true] %s383
      %386 = dma.vmem_to_hbm [thread:$0]  %s384, 16, %s3, [#allocation8]
    $region83: #{custom-call.2} parent=1 // pred_fallthru
      _
    // Predicated region
    $region84: #{custom-call.2} parent=1 // pred_check
      _
    $region85: #{custom-call.2} parent=1 // pred_check_branch
      %388 = sbr.rel (0) target = $region87
    $region86: #{custom-call.2} parent=1 // pred_region
      _
    $region87: #{custom-call.2} parent=1 // pred_fallthru
      _
    // Predicated region
    $region88: #{custom-call.2} parent=1 // pred_check
      _
    $region89: #{custom-call.2} parent=1 // pred_check_branch
      %390 = sbr.rel (0) target = $region91
    $region90: #{custom-call.2} parent=1 // pred_region
      %391 = dma.done [#allocation8], 16
    $region91: #{custom-call.2} parent=1 // pred_fallthru
      _
    %392 = vsyncpa [#allocation8], 1

// kernel: invconv_near_forward.1
$region0: #{invconv_near_forward.1}
  #allocation0 [shape = 'u32[]', space=smem, size = 0x4, offset = 0x4, fixed_abs, tag = 'smem constant byte address 0x4 - core index']
  #allocation1 [shape = 'u32[144,128]{1,0:T(1,128)}', space=vmem, size = 0x12000, scoped, tag = 'internal scratch']
  %s0 = inlined_call_operand.vmem [shape: f32[8,8], index: 0, kind: input, shape index: {}]
  %s1 = inlined_call_operand.vmem [shape: f32[2,8,128], index: 1, kind: input, shape index: {}]
  %s2 = inlined_call_operand.vmem [shape: f32[2,1,128], index: 2, kind: input, shape index: {}]
  %s3 = inlined_call_operand.hbm [shape: f32[2,8,128], index: 3, kind: output, shape index: {}]
  %s4 = sld [smem:[#allocation0]]
  $region45: #{invconv_near_forward.1} parent=0
    _
  %s6 = ssub.s32 1, %s4
  %s7 = scalar_select 0, %s6, %s4
  $region1: #{invconv_near_forward.1} parent=0
    #allocation2 [shape = 'u8[8192]{0}', space=vmem, size = 0x2000, scoped, tag = 'output window, operand 0']
    #allocation3 [shape = 's32[2]{0}', space=sflag, size = 0x8, scoped, tag = 'scoped memory for invconv_near_forward.1']
    %8 = vsyncpa [#allocation3], 0
    %s9 = scalar_lea.sflag [#allocation3], 1
    %10 = vsyncpa %s9, 0
    loop: start=0, step=1, limit=4
    $region2: #{invconv_near_forward.1} parent=1 // loop_pre_header
      _
    $region3: #{invconv_near_forward.1} parent=1 // loop_header
      %s12 = sphi 0, %s16
      %p13 = scmp.ge.s32.totalorder %s12, 4
      %s19 = sphi 0, %s31
      %s20 = sphi 0, %s27
      %s21 = sphi 0, %s19
      %s22 = sphi 0, %s20
      %s23 = sphi 0, %s21
      %s24 = sphi 0, %s22
      %s32 = sphi 0, %s32
      %s34 = sphi 0, %s32
      %s35 = sphi 0, %s34
      %s49 = sphi 0, %s35
      %s57 = sphi 0, %s59
      %s60 = sphi 0, %s57
      %s61 = sphi 0, %s60
      %s77 = sphi 0, %s61
      %s85 = sphi 0, %s87
      %s88 = sphi 0, %s85
      %s89 = sphi 0, %s88
      %s105 = sphi 0, %s89
      %s113 = sphi 0, %s115
      %s116 = sphi 0, %s113
      %s117 = sphi 0, %s116
      %s133 = sphi 0, %s117
    $region4: #{invconv_near_forward.1} parent=1 // loop_header_branch
      %15 = sbr.rel (%p13) target = $region8
    $region5: #{invconv_near_forward.1} parent=1 // loop_body
      %s17 = ssub.s32 %s12, 1
      %s18 = ssub.s32 %s12, 2
      %s25 = sadd.s32 1, %s20
      %p26 = scmp.ge.s32.totalorder %s25, 1
      %s27 = scalar_select %p26, 0, %s25
      %s28 = sadd.s32 1, %s19
      %s29 = scalar_select %p26, %s28, %s19
      %p30 = scmp.ge.s32.totalorder %s29, 2
      %s31 = scalar_select %p30, 0, %s29
      %s33 = sadd.s32 %s32, 1
      %p36 = scmp.eq.s32.totalorder %s12, 1
      %p37 = scmp.ne.s32.totalorder %s32, %s34
      %p38 = scmp.eq.s32.totalorder %s12, 0
      %p39 = por %p37, %p38
      %p40 = scmp.ne.s32.totalorder %s32, %s34
      %p41 = scmp.eq.s32.totalorder %s17, 1
      %p42 = por %p40, %p41
      %p43 = scmp.ne.s32.totalorder %s34, %s35
      %p44 = scmp.eq.s32.totalorder %s17, 0
      %p45 = por %p43, %p44
      %p46 = scmp.ne.s32.totalorder %s34, %s35
      %p47 = scmp.eq.s32.totalorder %s18, 1
      %p48 = por %p46, %p47
      %p50 = scmp.ne.s32.totalorder %s35, %s49
      %p51 = scmp.eq.s32.totalorder %s18, 0
      %p52 = por %p50, %p51
      %s53 = ssub.s32 %s19, %s31
      %s54 = ssub.s32 %s20, %s27
      %s55 = sor.u32 %s53, %s54
      %p56 = scmp.eq.s32.totalorder %s55, 0
      %s58 = sadd.s32 %s57, 1
      %s59 = scalar_select %p56, %s57, %s58
      %p62 = pneg %p56
      %p63 = scmp.eq.s32.totalorder %s12, 1
      %p64 = por %p62, %p63
      %p65 = scmp.ne.s32.totalorder %s57, %s60
      %p66 = scmp.eq.s32.totalorder %s12, 0
      %p67 = por %p65, %p66
      %p68 = scmp.ne.s32.totalorder %s57, %s60
      %p69 = scmp.eq.s32.totalorder %s17, 1
      %p70 = por %p68, %p69
      %p71 = scmp.ne.s32.totalorder %s60, %s61
      %p72 = scmp.eq.s32.totalorder %s17, 0
      %p73 = por %p71, %p72
      %p74 = scmp.ne.s32.totalorder %s60, %s61
      %p75 = scmp.eq.s32.totalorder %s18, 1
      %p76 = por %p74, %p75
      %p78 = scmp.ne.s32.totalorder %s61, %s77
      %p79 = scmp.eq.s32.totalorder %s18, 0
      %p80 = por %p78, %p79
      %s81 = ssub.s32 %s19, %s31
      %s82 = ssub.s32 %s20, %s27
      %s83 = sor.u32 %s81, %s82
      %p84 = scmp.eq.s32.totalorder %s83, 0
      %s86 = sadd.s32 %s85, 1
      %s87 = scalar_select %p84, %s85, %s86
      %p90 = pneg %p84
      %p91 = scmp.eq.s32.totalorder %s12, 1
      %p92 = por %p90, %p91
      %p93 = scmp.ne.s32.totalorder %s85, %s88
      %p94 = scmp.eq.s32.totalorder %s12, 0
      %p95 = por %p93, %p94
      %p96 = scmp.ne.s32.totalorder %s85, %s88
      %p97 = scmp.eq.s32.totalorder %s17, 1
      %p98 = por %p96, %p97
      %p99 = scmp.ne.s32.totalorder %s88, %s89
      %p100 = scmp.eq.s32.totalorder %s17, 0
      %p101 = por %p99, %p100
      %p102 = scmp.ne.s32.totalorder %s88, %s89
      %p103 = scmp.eq.s32.totalorder %s18, 1
      %p104 = por %p102, %p103
      %p106 = scmp.ne.s32.totalorder %s89, %s105
      %p107 = scmp.eq.s32.totalorder %s18, 0
      %p108 = por %p106, %p107
      %s109 = ssub.s32 %s19, %s31
      %s110 = ssub.s32 %s20, %s27
      %s111 = sor.u32 %s109, %s110
      %p112 = scmp.eq.s32.totalorder %s111, 0
      %s114 = sadd.s32 %s113, 1
      %s115 = scalar_select %p112, %s113, %s114
      %p118 = pneg %p112
      %p119 = scmp.eq.s32.totalorder %s12, 1
      %p120 = por %p118, %p119
      %p121 = scmp.ne.s32.totalorder %s113, %s116
      %p122 = scmp.eq.s32.totalorder %s12, 0
      %p123 = por %p121, %p122
      %p124 = scmp.ne.s32.totalorder %s113, %s116
      %p125 = scmp.eq.s32.totalorder %s17, 1
      %p126 = por %p124, %p125
      %p127 = scmp.ne.s32.totalorder %s116, %s117
      %p128 = scmp.eq.s32.totalorder %s17, 0
      %p129 = por %p127, %p128
      %p130 = scmp.ne.s32.totalorder %s116, %s117
      %p131 = scmp.eq.s32.totalorder %s18, 1
      %p132 = por %p130, %p131
      %p134 = scmp.ne.s32.totalorder %s117, %s133
      %p135 = scmp.eq.s32.totalorder %s18, 0
      %p136 = por %p134, %p135
      %p137 = scmp.le.s32.totalorder 1, %s12
      %p138 = scmp.lt.s32.totalorder %s12, 3
      %p139 = pnand %p137, %p138
      %p140 = pneg %p139
      // Predicated region
      $region9: #{invconv_near_forward.1} parent=5 // pred_check
        _
      $region10: #{invconv_near_forward.1} parent=5 // pred_check_branch
        %142 = sbr.rel (%p139) target = $region12
      $region11: #{invconv_near_forward.1} parent=5 // pred_region
        %s143 = ssub.s32 %s12, 1
        // Predicated region
        $region13: #{invconv_near_forward.1} parent=11 // pred_check
          %p144 = pneg %p45
        $region14: #{invconv_near_forward.1} parent=11 // pred_check_branch
          %146 = sbr.rel (%p144) target = $region16
        $region15: #{invconv_near_forward.1} parent=11 // pred_region
          _
        $region16: #{invconv_near_forward.1} parent=11 // pred_fallthru
          _
      $region12: #{invconv_near_forward.1} parent=5 // pred_fallthru
        _
      %p147 = scmp.lt.s32.totalorder %s12, 2
      // Predicated region
      $region17: #{invconv_near_forward.1} parent=5 // pred_check
        %p148 = pneg %p147
      $region18: #{invconv_near_forward.1} parent=5 // pred_check_branch
        %150 = sbr.rel (%p148) target = $region20
      $region19: #{invconv_near_forward.1} parent=5 // pred_region
        // Predicated region
        $region21: #{invconv_near_forward.1} parent=19 // pred_check
          %p151 = pneg %p67
        $region22: #{invconv_near_forward.1} parent=19 // pred_check_branch
          %153 = sbr.rel (%p151) target = $region24
        $region23: #{invconv_near_forward.1} parent=19 // pred_region
          %p154 = scmp.lt.s32.totalorder %s19, 1
          %s155 = scalar_select %p154, %s19, 1
          %p156 = scmp.lt.s32.totalorder %s20, 0
          %s157 = scalar_select %p156, %s20, 0
          %s158 = sadd.s32 %s157, %s155
          %s159 = smul.addr %s158, 8
          %s160 = scalar_lea.vmem %s1, %s159
        $region24: #{invconv_near_forward.1} parent=19 // pred_fallthru
          _
        // Predicated region
        $region25: #{invconv_near_forward.1} parent=19 // pred_check
          %p161 = pneg %p95
        $region26: #{invconv_near_forward.1} parent=19 // pred_check_branch
          %163 = sbr.rel (%p161) target = $region28
        $region27: #{invconv_near_forward.1} parent=19 // pred_region
          %p164 = scmp.lt.s32.totalorder %s19, 1
          %s165 = scalar_select %p164, %s19, 1
          %p166 = scmp.lt.s32.totalorder %s20, 0
          %s167 = scalar_select %p166, %s20, 0
          %s168 = sadd.s32 %s167, %s165
          %s169 = scalar_lea.vmem %s2, %s168
        $region28: #{invconv_near_forward.1} parent=19 // pred_fallthru
          _
      $region20: #{invconv_near_forward.1} parent=5 // pred_fallthru
        _
      %p170 = scmp.le.s32.totalorder 1, %s12
      %p171 = scmp.lt.s32.totalorder %s12, 3
      %p172 = pnand %p170, %p171
      %p173 = pneg %p172
      // Predicated region
      $region29: #{invconv_near_forward.1} parent=5 // pred_check
        _
      $region30: #{invconv_near_forward.1} parent=5 // pred_check_branch
        %175 = sbr.rel (%p172) target = $region32
      $region31: #{invconv_near_forward.1} parent=5 // pred_region
        %s176 = ssub.s32 %s12, 1
        %p177 = pneg %p45
        %p178 = pneg %p42
        %p179 = scmp.lt.s32.totalorder %s21, 1
        %s180 = scalar_select %p179, %s21, 1
        %p181 = scmp.lt.s32.totalorder %s22, 0
        %s182 = scalar_select %p181, %s22, 0
        %s183 = sadd.s32 %s182, %s180
        %s184 = smul.addr %s183, 8
        %s185 = scalar_lea.vmem %s1, %s184
        %p186 = pneg %p73
        %p187 = pneg %p70
        %p188 = scmp.lt.s32.totalorder %s21, 1
        %s189 = scalar_select %p188, %s21, 1
        %p190 = scmp.lt.s32.totalorder %s22, 0
        %s191 = scalar_select %p190, %s22, 0
        %s192 = sadd.s32 %s191, %s189
        %s193 = scalar_lea.vmem %s2, %s192
        %p194 = pneg %p101
        %p195 = pneg %p98
        %p196 = pneg %p129
        %p197 = pneg %p126
        %s198 = sand.u32 %s116, 1
        %s199 = scalar_lea.sflag [#allocation3], %s198
        %s200 = sand.u32 %s116, 1
        %s201 = smul.addr %s200, 8
        %s202 = scalar_lea.vmem [#allocation2], %s201
        %p203 = scmp.lt.s32.totalorder %s21, 1
        %s204 = scalar_select %p203, %s21, 1
        %p205 = scmp.lt.s32.totalorder %s22, 0
        %s206 = scalar_select %p205, %s22, 0
        %s207 = sadd.s32 %s206, %s204
        %s208 = smul.addr %s207, 8
        %s209 = scalar_lea.vmem %s1, %s208
        %p210 = scmp.lt.s32.totalorder %s21, 1
        %s211 = scalar_select %p210, %s21, 1
        %p212 = scmp.lt.s32.totalorder %s22, 0
        %s213 = scalar_select %p212, %s22, 0
        %s214 = sadd.s32 %s213, %s211
        %s215 = scalar_lea.vmem %s2, %s214
        %v216 = vld [vmem:[%s0] sm:$0xff]
        %v217 = vld [vmem:[%s209] sm:$0xff]
        %vm218 = vcmask 64512
        %v220 = vsel %vm218, %v216, 0
        %222 = vmatprep.subr.mxu0 0.0
        %223 = vmatpush1.msra.mxu0 %v217
        %224 = vmatprep.subr.mxu0 0.0
        %225 = vmatpush1.msra.mxu0 0.0
        %226 = vmatprep.subr.mxu0 0.0
        %227 = vmatpush1.msra.mxu0 0.0
        %228 = vmatprep.subr.mxu0 0.0
        %229 = vmatpush1.msra.mxu0 0.0
        %230 = vmatprep.subr.mxu0 0.0
        %231 = vmatpush1.msra.mxu0 0.0
        %232 = vmatprep.subr.mxu0 0.0
        %233 = vmatpush1.msra.mxu0 0.0
        %234 = vmatprep.subr.mxu0 0.0
        %235 = vmatpush1.msra.mxu0 0.0
        %236 = vmatprep.subr.mxu0 0.0
        %237 = vmatpush1.msra.mxu0 0.0
        %238 = vmatprep.subr.mxu0 0.0
        %239 = vmatpush1.msra.mxu0 0.0
        %240 = vmatprep.subr.mxu0 0.0
        %241 = vmatpush1.msra.mxu0 0.0
        %242 = vmatprep.subr.mxu0 0.0
        %243 = vmatpush1.msra.mxu0 0.0
        %244 = vmatprep.subr.mxu0 0.0
        %245 = vmatpush1.msra.mxu0 0.0
        %246 = vmatprep.subr.mxu0 0.0
        %247 = vmatpush1.msra.mxu0 0.0
        %248 = vmatprep.subr.mxu0 0.0
        %249 = vmatpush1.msra.mxu0 0.0
        %250 = vmatprep.subr.mxu0 0.0
        %251 = vmatpush1.msra.mxu0 0.0
        %252 = vmatprep.subr.mxu0 0.0
        %253 = vmatpush1.msra.mxu0 0.0
        %254 = vmatprep.subr.mxu0 0.0
        %255 = vmatpush1.msra.mxu0 0.0
        %256 = vmatprep.subr.mxu0 0.0
        %257 = vmatpush1.msra.mxu0 0.0
        %258 = vmatprep.subr.mxu0 0.0
        %259 = vmatpush1.msra.mxu0 0.0
        %260 = vmatprep.subr.mxu0 0.0
        %261 = vmatpush1.msra.mxu0 0.0
        %262 = vmatprep.subr.mxu0 0.0
        %263 = vmatpush1.msra.mxu0 0.0
        %264 = vmatprep.subr.mxu0 0.0
        %265 = vmatpush1.msra.mxu0 0.0
        %266 = vmatprep.subr.mxu0 0.0
        %267 = vmatpush1.msra.mxu0 0.0
        %268 = vmatprep.subr.mxu0 0.0
        %269 = vmatpush1.msra.mxu0 0.0
        %270 = vmatprep.subr.mxu0 0.0
        %271 = vmatpush1.msra.mxu0 0.0
        %272 = vmatprep.subr.mxu0 0.0
        %273 = vmatpush1.msra.mxu0 0.0
        %274 = vmatprep.subr.mxu0 0.0
        %275 = vmatpush1.msra.mxu0 0.0
        %276 = vmatprep.subr.mxu0 0.0
        %277 = vmatpush1.msra.mxu0 0.0
        %278 = vmatprep.subr.mxu0 0.0
        %279 = vmatpush1.msra.mxu0 0.0
        %280 = vmatprep.subr.mxu0 0.0
        %281 = vmatpush1.msra.mxu0 0.0
        %282 = vmatprep.subr.mxu0 0.0
        %283 = vmatpush1.msra.mxu0 0.0
        %284 = vmatprep.subr.mxu0 0.0
        %285 = vmatpush1.msra.mxu0 0.0
        %286 = vmatprep.mubr.f32.mxu0 0.0
        %287 = vmatmul.mubr.f32.gmra.mrb[0].mxu0 %v220
        %v288 = vpop.f32.mrb[0].mxu0
        %v289 = vadd.f32 0.0, %v288
        %v290 = vpop.f32.mrb[0].mxu0
        %291 = vdwg.mxu0
        %v292 = vld [vmem:[%s215] sm:$0x1]
        %v294 = vlaneseq
        %v295 = vshrl.u32 %v294, 7
        %v296 = vsub.s32 0, %v295
        %v297 = vrot.slane %v292, %v296
        %v299 = vmul.f32 %v289, %v297
        %300 = vst [vmem:[%s202] sm:$0xff] %v299
        %s301 = sand.u32 %s116, 1
        %s302 = scalar_lea.sflag [#allocation3], %s301
        %s303 = sand.u32 %s116, 1
        %s304 = smul.addr %s303, 8
        %s305 = scalar_lea.vmem [#allocation2], %s304
        // Predicated region
        $region33: #{invconv_near_forward.1} parent=31 // pred_check
          %p306 = pneg %p126
        $region34: #{invconv_near_forward.1} parent=31 // pred_check_branch
          %308 = sbr.rel (%p306) target = $region36
        $region35: #{invconv_near_forward.1} parent=31 // pred_region
          %s310 = ssub.s32 128, 128
          %311 = vsyncadd %s302, %s310
          %s312 = sadd.s32 %s22, %s21
          %s313 = smul.addr %s312, 128
          %s314 = scalar_lea.hbm %s3, %s313
          %s316 = sshll.u32 %s305, 4
          %s317 = int_to_ptr.vmem [resolvable:$true] %s316
          %319 = dma.vmem_to_hbm [thread:$0]  %s317, 128, %s314, %s302
        $region36: #{invconv_near_forward.1} parent=31 // pred_fallthru
          _
      $region32: #{invconv_near_forward.1} parent=5 // pred_fallthru
        _
      %p320 = scmp.le.s32.totalorder 2, %s12
      // Predicated region
      $region37: #{invconv_near_forward.1} parent=5 // pred_check
        %p321 = pneg %p320
      $region38: #{invconv_near_forward.1} parent=5 // pred_check_branch
        %323 = sbr.rel (%p321) target = $region40
      $region39: #{invconv_near_forward.1} parent=5 // pred_region
        %s324 = ssub.s32 %s12, 2
        // Predicated region
        $region41: #{invconv_near_forward.1} parent=39 // pred_check
          %p325 = pneg %p132
        $region42: #{invconv_near_forward.1} parent=39 // pred_check_branch
          %327 = sbr.rel (%p325) target = $region44
        $region43: #{invconv_near_forward.1} parent=39 // pred_region
          %s328 = sand.u32 %s117, 1
          %s329 = scalar_lea.sflag [#allocation3], %s328
          %s330 = sand.u32 %s117, 1
          %s331 = smul.addr %s330, 8
          %s332 = scalar_lea.vmem [#allocation2], %s331
          %333 = dma.done %s329, 128
        $region44: #{invconv_near_forward.1} parent=39 // pred_fallthru
          _
      $region40: #{invconv_near_forward.1} parent=5 // pred_fallthru
        _
    $region6: #{invconv_near_forward.1} parent=1 // loop_footer
      %s16 = sadd.s32 1, %s12
    $region7: #{invconv_near_forward.1} parent=1 // loop_footer_branch
      %11 = sbr.rel target = $region3
    $region8: #{invconv_near_forward.1} parent=1 // loop_exit
      _
    %334 = vsyncpa [#allocation3], 1
    %s335 = scalar_lea.sflag [#allocation3], 1
    %336 = vsyncpa %s335, 1

</llo_original>
